<compile_context>
chip_gen: v7x
topology: tpu7x:2x2x1
jax: 0.10.0
libtpu: 0.0.40
codegen_flags: <defaults>
</compile_context>

<pallas_src>
import jax
import jax.numpy as jnp
import numpy as np
from jax.experimental import pallas as pl
from jax.experimental.pallas import tpu as pltpu

C_IN, C_OUT = 3, 16
H, W = 32, 32               # Linear(16*32*32, 10) implies 32x32 spatial input
HW = H * W
KH = KW = 3
D_IN = C_IN * HW            # 3072
FC_OUT = 10


def _affine_kernel(x_ref, w_ref, b_ref, out_ref):
    # x_ref  : (bb, D_IN)      f32  input block (batch on sublanes, features on lanes)
    # w_ref  : (FC_OUT, D_IN)  f32  fully-folded conv(+bias)+fc weight
    # b_ref  : (FC_OUT, 1)     f32  fully-folded bias
    # out_ref: (FC_OUT, bb)    f32  lane-dense output (batch on lanes)
    out_ref[...] = b_ref[...] + jax.lax.dot_general(
        w_ref[...], x_ref[...],
        (((1,), (1,)), ((), ())),          # contract both on D_IN -> (FC_OUT, bb)
        preferred_element_type=jnp.float32)


def conv_fc_forward(x, conv_w, conv_b, fc_w, fc_b, *, block_b=256):
    """x: (N, 3, 32, 32) f32 NCHW. Returns (N, 10) f32."""
    n = x.shape[0]
    if n <= block_b:
        bb = max(8, int(pl.cdiv(n, 8)) * 8)      # one grid step, sublane-aligned
        n_pad = bb
    else:
        bb = block_b                             # multiple of 128 -> lane-dense out
        n_pad = int(pl.cdiv(n, bb)) * bb

    # Contiguous flatten (no transpose, no extra HBM pass over the input).
    x_flat = x.reshape(n, D_IN)
    if n_pad != n:
        x_flat = jnp.pad(x_flat, ((0, n_pad - n), (0, 0)))

    # ---- full linearization of conv -> flatten -> fc (wrapper-side, f32) ----
    # W_eff[o, c, h, w] = sum_{k,dh,dw} conv_w[k,c,dh,dw] * fc_w[o,k,h-dh+1,w-dw+1]
    # (zero-padded), i.e. a "same" correlation of fc_w (as a (10,16,32,32) image)
    # with the (k<->c)-transposed, spatially-flipped conv kernel.
    fw4 = fc_w.reshape(FC_OUT, C_OUT, H, W).astype(jnp.float32)
    rk = jnp.flip(jnp.transpose(conv_w.astype(jnp.float32), (1, 0, 2, 3)),
                  axis=(2, 3))                                   # (C_IN, C_OUT, 3, 3)
    w_eff = jax.lax.conv_general_dilated(
        fw4, rk, window_strides=(1, 1), padding=((1, 1), (1, 1)),
        dimension_numbers=("NCHW", "OIHW", "NCHW"))              # (FC_OUT, C_IN, H, W)
    w_eff = w_eff.reshape(FC_OUT, D_IN)                          # (10, 3072) f32
    b_eff = (fc_b.astype(jnp.float32)
             + fw4.sum(axis=(2, 3)) @ conv_b.astype(jnp.float32)
             ).reshape(FC_OUT, 1)                                # (10, 1) f32

    out_t = pl.pallas_call(
        _affine_kernel,
        out_shape=jax.ShapeDtypeStruct((FC_OUT, n_pad), jnp.float32),
        grid_spec=pltpu.PrefetchScalarGridSpec(
            num_scalar_prefetch=0,
            grid=(n_pad // bb,),
            in_specs=[
                pl.BlockSpec((bb, D_IN), lambda i: (i, 0)),
                pl.BlockSpec((FC_OUT, D_IN), lambda i: (0, 0)),
                pl.BlockSpec((FC_OUT, 1), lambda i: (0, 0)),
            ],
            out_specs=pl.BlockSpec((FC_OUT, bb), lambda i: (0, i)),
        ),
        compiler_params=pltpu.CompilerParams(
            dimension_semantics=("parallel",)),
    )(x_flat, w_eff, b_eff)

    return out_t[:, :n].T                                        # (N, 10)


if __name__ == "__main__":
    key = jax.random.PRNGKey(0)
    k1, k2, k3, k4, k5 = jax.random.split(key, 5)
    N = 2
    x = jax.random.normal(k1, (N, C_IN, H, W), jnp.float32)

    # Deterministic synthetic parameters (shapes from CustomModel.__init__).
    conv_w = jax.random.normal(k2, (C_OUT, C_IN, KH, KW), jnp.float32) * 0.1
    conv_b = jax.random.normal(k3, (C_OUT,), jnp.float32) * 0.1
    fc_w = jax.random.normal(k4, (FC_OUT, C_OUT * HW), jnp.float32) * 0.01
    fc_b = jax.random.normal(k5, (FC_OUT,), jnp.float32) * 0.1
    # NOTE: self.some_tensor / submodule.sub_tensor are unused in forward(),
    # so they are intentionally not materialized.

    out = jax.jit(conv_fc_forward)(x, conv_w, conv_b, fc_w, fc_b)
    out = jax.block_until_ready(out)

    # Pure-JAX f32 reference (independent of the kernel's weight-fold path).
    ref_conv = jax.lax.conv_general_dilated(
        x, conv_w, window_strides=(1, 1), padding=((1, 1), (1, 1)),
        dimension_numbers=("NCHW", "OIHW", "NCHW")) + conv_b.reshape(1, C_OUT, 1, 1)
    ref = ref_conv.reshape(N, -1) @ fc_w.T + fc_b

    assert out.shape == (N, FC_OUT)
    np.testing.assert_allclose(np.asarray(out), np.asarray(ref),
                               rtol=2e-2, atol=2e-2)
    print("KERNEL_OK")
</pallas_src>

<mosaic_0001>
module attributes {stable_mosaic.version = 11 : i64} {
  func.func @_affine_kernel(%arg0: i32, %arg1: memref<8x3072xf32, #tpu.memory_space<vmem>>, %arg2: memref<10x3072xf32, #tpu.memory_space<vmem>>, %arg3: memref<10x1xf32, #tpu.memory_space<vmem>>, %arg4: memref<10x8xf32, #tpu.memory_space<vmem>>) attributes {dimension_semantics = [#tpu.dimension_semantics<parallel>], iteration_bounds = array<i64: 1>, scalar_prefetch = 0 : i64, scratch_operands = 0 : i64, tpu.core_type = #tpu.core_type<tc>, window_params = [{transform_indices = @transform_0, window_bounds = array<i64: 8, 3072>}, {pipeline_mode = #tpu.pipeline_mode<synchronous>, transform_indices = @transform_1, window_bounds = array<i64: 10, 3072>}, {pipeline_mode = #tpu.pipeline_mode<synchronous>, transform_indices = @transform_2, window_bounds = array<i64: 10, 1>}, {transform_indices = @transform_3, window_bounds = array<i64: 10, 8>}]} {
    %c0 = arith.constant 0 : index
    %c0_0 = arith.constant 0 : index
    %0 = vector.load %arg3[%c0, %c0_0] : memref<10x1xf32, #tpu.memory_space<vmem>>, vector<10x1xf32>
    %c0_1 = arith.constant 0 : index
    %c0_2 = arith.constant 0 : index
    %1 = vector.load %arg2[%c0_1, %c0_2] : memref<10x3072xf32, #tpu.memory_space<vmem>>, vector<10x3072xf32>
    %c0_3 = arith.constant 0 : index
    %c0_4 = arith.constant 0 : index
    %2 = vector.load %arg1[%c0_3, %c0_4] : memref<8x3072xf32, #tpu.memory_space<vmem>>, vector<8x3072xf32>
    %cst = arith.constant dense<0.000000e+00> : vector<10x8xf32>
    %3 = tpu.matmul %1, %2, %cst {dimension_numbers = #tpu.dot_dimension_numbers<[1], [1], [0], [0], [0, 0, 1, 0], [], []>} : vector<10x3072xf32>, vector<8x3072xf32>, vector<10x8xf32> -> vector<10x8xf32>
    %4 = vector.broadcast %0 : vector<10x1xf32> to vector<10x8xf32>
    %5 = arith.addf %4, %3 : vector<10x8xf32>
    %c0_5 = arith.constant 0 : index
    %c0_6 = arith.constant 0 : index
    %6 = vector.load %arg4[%c0_5, %c0_6] : memref<10x8xf32, #tpu.memory_space<vmem>>, vector<10x8xf32>
    tpu.vector_store %arg4[%c0_5, %c0_6], %5 {strides = array<i32>} : memref<10x8xf32, #tpu.memory_space<vmem>>, vector<10x8xf32>,
    return
  }
  func.func @transform_0(%arg0: i32) -> (i32, i32) {
    %c0_i32 = arith.constant 0 : i32
    %c0_i32_0 = arith.constant 0 : i32
    return %arg0, %c0_i32 : i32, i32
  }
  func.func @transform_1(%arg0: i32) -> (i32, i32) {
    %c0_i32 = arith.constant 0 : i32
    %c0_i32_0 = arith.constant 0 : i32
    %c0_i32_1 = arith.constant 0 : i32
    return %c0_i32, %c0_i32_0 : i32, i32
  }
  func.func @transform_2(%arg0: i32) -> (i32, i32) {
    %c0_i32 = arith.constant 0 : i32
    %c0_i32_0 = arith.constant 0 : i32
    %c0_i32_1 = arith.constant 0 : i32
    return %c0_i32, %c0_i32_0 : i32, i32
  }
  func.func @transform_3(%arg0: i32) -> (i32, i32) {
    %c0_i32 = arith.constant 0 : i32
    %c0_i32_0 = arith.constant 0 : i32
    return %c0_i32, %arg0 : i32, i32
  }
}

</mosaic_0001>

<llo_original>
// kernel: conv_fc_forward.1
$region0: #{conv_fc_forward.1}
  #allocation0 [shape = 'u32[]', space=smem, size = 0x4, offset = 0x4, fixed_abs, tag = 'smem constant byte address 0x4 - core index']
  #allocation1 [shape = 'u32[144,128]{1,0:T(1,128)}', space=vmem, size = 0x12000, scoped, tag = 'internal scratch']
  %s0 = inlined_call_operand.vmem [shape: f32[8,3072], index: 0, kind: input, shape index: {}]
  %s1 = inlined_call_operand.vmem [shape: f32[10,3072], index: 1, kind: input, shape index: {}]
  %s2 = inlined_call_operand.vmem [shape: f32[10,1], index: 2, kind: input, shape index: {}]
  %s3 = inlined_call_operand.vmem [shape: f32[10,8], index: 3, kind: output, shape index: {}]
  %s4 = sld [smem:[#allocation0]]
  $region22: #{conv_fc_forward.1} parent=0
    _
  %s6 = ssub.s32 1, %s4
  %s7 = scalar_select 0, %s6, %s4
  // Predicated region
  $region2: #{conv_fc_forward.1} parent=0 // pred_check
    _
  $region3: #{conv_fc_forward.1} parent=0 // pred_check_branch
    %9 = sbr.rel (0) target = $region5
  $region4: #{conv_fc_forward.1} parent=0 // pred_region
    _
  $region5: #{conv_fc_forward.1} parent=0 // pred_fallthru
    _
  // Predicated region
  $region6: #{conv_fc_forward.1} parent=0 // pred_check
    _
  $region7: #{conv_fc_forward.1} parent=0 // pred_check_branch
    %11 = sbr.rel (0) target = $region9
  $region8: #{conv_fc_forward.1} parent=0 // pred_region
    _
  $region9: #{conv_fc_forward.1} parent=0 // pred_fallthru
    _
  // Predicated region
  $region10: #{conv_fc_forward.1} parent=0 // pred_check
    _
  $region11: #{conv_fc_forward.1} parent=0 // pred_check_branch
    %13 = sbr.rel (0) target = $region13
  $region12: #{conv_fc_forward.1} parent=0 // pred_region
    _
  $region13: #{conv_fc_forward.1} parent=0 // pred_fallthru
    _
  %v14 = vld [vmem:[%s2] sm:$0xff]
  %v15 = vld [vmem:[%s2 + $0x8] sm:$0x3]
  %v16 = vld [vmem:[%s1] sm:$0xff]
  %v17 = vld [vmem:[%s1 + $0x8] sm:$0xff]
  %v18 = vld [vmem:[%s1 + $0x10] sm:$0xff]
  %v19 = vld [vmem:[%s1 + $0x18] sm:$0xff]
  %v20 = vld [vmem:[%s1 + $0x20] sm:$0xff]
  %v21 = vld [vmem:[%s1 + $0x28] sm:$0xff]
  %v22 = vld [vmem:[%s1 + $0x30] sm:$0xff]
  %v23 = vld [vmem:[%s1 + $0x38] sm:$0xff]
  %v24 = vld [vmem:[%s1 + $0x40] sm:$0xff]
  %v25 = vld [vmem:[%s1 + $0x48] sm:$0xff]
  %v26 = vld [vmem:[%s1 + $0x50] sm:$0xff]
  %v27 = vld [vmem:[%s1 + $0x58] sm:$0xff]
  %v28 = vld [vmem:[%s1 + $0x60] sm:$0xff]
  %v29 = vld [vmem:[%s1 + $0x68] sm:$0xff]
  %v30 = vld [vmem:[%s1 + $0x70] sm:$0xff]
  %v31 = vld [vmem:[%s1 + $0x78] sm:$0xff]
  %v32 = vld [vmem:[%s1 + $0x80] sm:$0xff]
  %v33 = vld [vmem:[%s1 + $0x88] sm:$0xff]
  %v34 = vld [vmem:[%s1 + $0x90] sm:$0xff]
  %v35 = vld [vmem:[%s1 + $0x98] sm:$0xff]
  %v36 = vld [vmem:[%s1 + $0xa0] sm:$0xff]
  %v37 = vld [vmem:[%s1 + $0xa8] sm:$0xff]
  %v38 = vld [vmem:[%s1 + $0xb0] sm:$0xff]
  %v39 = vld [vmem:[%s1 + $0xb8] sm:$0xff]
  %v40 = vld [vmem:[%s1 + $0xc0] sm:$0x3]
  %v41 = vld [vmem:[%s1 + $0xc8] sm:$0x3]
  %v42 = vld [vmem:[%s1 + $0xd0] sm:$0x3]
  %v43 = vld [vmem:[%s1 + $0xd8] sm:$0x3]
  %v44 = vld [vmem:[%s1 + $0xe0] sm:$0x3]
  %v45 = vld [vmem:[%s1 + $0xe8] sm:$0x3]
  %v46 = vld [vmem:[%s1 + $0xf0] sm:$0x3]
  %v47 = vld [vmem:[%s1 + $0xf8] sm:$0x3]
  %v48 = vld [vmem:[%s1 + $0x100] sm:$0x3]
  %v49 = vld [vmem:[%s1 + $0x108] sm:$0x3]
  %v50 = vld [vmem:[%s1 + $0x110] sm:$0x3]
  %v51 = vld [vmem:[%s1 + $0x118] sm:$0x3]
  %v52 = vld [vmem:[%s1 + $0x120] sm:$0x3]
  %v53 = vld [vmem:[%s1 + $0x128] sm:$0x3]
  %v54 = vld [vmem:[%s1 + $0x130] sm:$0x3]
  %v55 = vld [vmem:[%s1 + $0x138] sm:$0x3]
  %v56 = vld [vmem:[%s1 + $0x140] sm:$0x3]
  %v57 = vld [vmem:[%s1 + $0x148] sm:$0x3]
  %v58 = vld [vmem:[%s1 + $0x150] sm:$0x3]
  %v59 = vld [vmem:[%s1 + $0x158] sm:$0x3]
  %v60 = vld [vmem:[%s1 + $0x160] sm:$0x3]
  %v61 = vld [vmem:[%s1 + $0x168] sm:$0x3]
  %v62 = vld [vmem:[%s1 + $0x170] sm:$0x3]
  %v63 = vld [vmem:[%s1 + $0x178] sm:$0x3]
  %v64 = vld [vmem:[%s0] sm:$0xff]
  %v65 = vld [vmem:[%s0 + $0x8] sm:$0xff]
  %v66 = vld [vmem:[%s0 + $0x10] sm:$0xff]
  %v67 = vld [vmem:[%s0 + $0x18] sm:$0xff]
  %v68 = vld [vmem:[%s0 + $0x20] sm:$0xff]
  %v69 = vld [vmem:[%s0 + $0x28] sm:$0xff]
  %v70 = vld [vmem:[%s0 + $0x30] sm:$0xff]
  %v71 = vld [vmem:[%s0 + $0x38] sm:$0xff]
  %v72 = vld [vmem:[%s0 + $0x40] sm:$0xff]
  %v73 = vld [vmem:[%s0 + $0x48] sm:$0xff]
  %v74 = vld [vmem:[%s0 + $0x50] sm:$0xff]
  %v75 = vld [vmem:[%s0 + $0x58] sm:$0xff]
  %v76 = vld [vmem:[%s0 + $0x60] sm:$0xff]
  %v77 = vld [vmem:[%s0 + $0x68] sm:$0xff]
  %v78 = vld [vmem:[%s0 + $0x70] sm:$0xff]
  %v79 = vld [vmem:[%s0 + $0x78] sm:$0xff]
  %v80 = vld [vmem:[%s0 + $0x80] sm:$0xff]
  %v81 = vld [vmem:[%s0 + $0x88] sm:$0xff]
  %v82 = vld [vmem:[%s0 + $0x90] sm:$0xff]
  %v83 = vld [vmem:[%s0 + $0x98] sm:$0xff]
  %v84 = vld [vmem:[%s0 + $0xa0] sm:$0xff]
  %v85 = vld [vmem:[%s0 + $0xa8] sm:$0xff]
  %v86 = vld [vmem:[%s0 + $0xb0] sm:$0xff]
  %v87 = vld [vmem:[%s0 + $0xb8] sm:$0xff]
  %88 = vmatprep.subr.mxu0 %v65
  %89 = vmatpush1.xpose.msra.mxu0 %v64
  %90 = vmatprep.subr.mxu0 0.0
  %91 = vmatpush1.xpose.msra.mxu0 0.0
  %92 = vmatprep.subr.mxu0 0.0
  %93 = vmatpush1.xpose.msra.mxu0 0.0
  %94 = vmatprep.subr.mxu0 0.0
  %95 = vmatpush1.xpose.msra.mxu0 0.0
  %96 = vmatprep.subr.mxu0 0.0
  %97 = vmatpush1.xpose.msra.mxu0 0.0
  %98 = vmatprep.subr.mxu0 0.0
  %99 = vmatpush1.xpose.msra.mxu0 0.0
  %100 = vmatprep.subr.mxu0 0.0
  %101 = vmatpush1.xpose.msra.mxu0 0.0
  %102 = vmatprep.subr.mxu0 0.0
  %103 = vmatpush1.xpose.msra.mxu0 0.0
  %104 = vmatprep.subr.mxu0 0.0
  %105 = vmatpush1.xpose.msra.mxu0 0.0
  %106 = vmatprep.subr.mxu0 0.0
  %107 = vmatpush1.xpose.msra.mxu0 0.0
  %108 = vmatprep.subr.mxu0 0.0
  %109 = vmatpush1.xpose.msra.mxu0 0.0
  %110 = vmatprep.subr.mxu0 0.0
  %111 = vmatpush1.xpose.msra.mxu0 0.0
  %112 = vmatprep.subr.mxu0 0.0
  %113 = vmatpush1.xpose.msra.mxu0 0.0
  %114 = vmatprep.subr.mxu0 0.0
  %115 = vmatpush1.xpose.msra.mxu0 0.0
  %116 = vmatprep.subr.mxu0 0.0
  %117 = vmatpush1.xpose.msra.mxu0 0.0
  %118 = vmatprep.subr.mxu0 0.0
  %119 = vmatpush1.xpose.msra.mxu0 0.0
  %120 = vmatprep.subr.mxu0 0.0
  %121 = vmatpush1.xpose.msra.mxu0 0.0
  %122 = vmatprep.subr.mxu0 0.0
  %123 = vmatpush1.xpose.msra.mxu0 0.0
  %124 = vmatprep.subr.mxu0 0.0
  %125 = vmatpush1.xpose.msra.mxu0 0.0
  %126 = vmatprep.subr.mxu0 0.0
  %127 = vmatpush1.xpose.msra.mxu0 0.0
  %128 = vmatprep.subr.mxu0 0.0
  %129 = vmatpush1.xpose.msra.mxu0 0.0
  %130 = vmatprep.subr.mxu0 0.0
  %131 = vmatpush1.xpose.msra.mxu0 0.0
  %132 = vmatprep.subr.mxu0 0.0
  %133 = vmatpush1.xpose.msra.mxu0 0.0
  %134 = vmatprep.subr.mxu0 0.0
  %135 = vmatpush1.xpose.msra.mxu0 0.0
  %136 = vmatprep.subr.mxu0 0.0
  %137 = vmatpush1.xpose.msra.mxu0 0.0
  %138 = vmatprep.subr.mxu0 0.0
  %139 = vmatpush1.xpose.msra.mxu0 0.0
  %140 = vmatprep.subr.mxu0 0.0
  %141 = vmatpush1.xpose.msra.mxu0 0.0
  %142 = vmatprep.subr.mxu0 0.0
  %143 = vmatpush1.xpose.msra.mxu0 0.0
  %144 = vmatprep.subr.mxu0 0.0
  %145 = vmatpush1.xpose.msra.mxu0 0.0
  %146 = vmatprep.subr.mxu0 0.0
  %147 = vmatpush1.xpose.msra.mxu0 0.0
  %148 = vmatprep.subr.mxu0 0.0
  %149 = vmatpush1.xpose.msra.mxu0 0.0
  %150 = vmatprep.subr.mxu0 0.0
  %151 = vmatpush1.xpose.msra.mxu0 0.0
  %152 = vmatprep.mubr.f32.mxu0 %v17
  %153 = vmatmul.mubr.f32.gmra.mrb[0].mxu0 %v16
  %v154 = vpop.f32.mrb[0].mxu0
  %v155 = vadd.f32 0.0, %v154
  %v156 = vpop.f32.mrb[0].mxu0
  %157 = vmatprep.mubr.f32.mxu0 %v41
  %158 = vmatmul.mubr.f32.gmra.mrb[0].mxu0 %v40
  %v159 = vpop.f32.mrb[0].mxu0
  %v160 = vadd.f32 0.0, %v159
  %v161 = vpop.f32.mrb[0].mxu0
  %162 = vdwg.mxu0
  %163 = vmatprep.subr.mxu0 %v67
  %164 = vmatpush1.xpose.msra.mxu0 %v66
  %165 = vmatprep.subr.mxu0 0.0
  %166 = vmatpush1.xpose.msra.mxu0 0.0
  %167 = vmatprep.subr.mxu0 0.0
  %168 = vmatpush1.xpose.msra.mxu0 0.0
  %169 = vmatprep.subr.mxu0 0.0
  %170 = vmatpush1.xpose.msra.mxu0 0.0
  %171 = vmatprep.subr.mxu0 0.0
  %172 = vmatpush1.xpose.msra.mxu0 0.0
  %173 = vmatprep.subr.mxu0 0.0
  %174 = vmatpush1.xpose.msra.mxu0 0.0
  %175 = vmatprep.subr.mxu0 0.0
  %176 = vmatpush1.xpose.msra.mxu0 0.0
  %177 = vmatprep.subr.mxu0 0.0
  %178 = vmatpush1.xpose.msra.mxu0 0.0
  %179 = vmatprep.subr.mxu0 0.0
  %180 = vmatpush1.xpose.msra.mxu0 0.0
  %181 = vmatprep.subr.mxu0 0.0
  %182 = vmatpush1.xpose.msra.mxu0 0.0
  %183 = vmatprep.subr.mxu0 0.0
  %184 = vmatpush1.xpose.msra.mxu0 0.0
  %185 = vmatprep.subr.mxu0 0.0
  %186 = vmatpush1.xpose.msra.mxu0 0.0
  %187 = vmatprep.subr.mxu0 0.0
  %188 = vmatpush1.xpose.msra.mxu0 0.0
  %189 = vmatprep.subr.mxu0 0.0
  %190 = vmatpush1.xpose.msra.mxu0 0.0
  %191 = vmatprep.subr.mxu0 0.0
  %192 = vmatpush1.xpose.msra.mxu0 0.0
  %193 = vmatprep.subr.mxu0 0.0
  %194 = vmatpush1.xpose.msra.mxu0 0.0
  %195 = vmatprep.subr.mxu0 0.0
  %196 = vmatpush1.xpose.msra.mxu0 0.0
  %197 = vmatprep.subr.mxu0 0.0
  %198 = vmatpush1.xpose.msra.mxu0 0.0
  %199 = vmatprep.subr.mxu0 0.0
  %200 = vmatpush1.xpose.msra.mxu0 0.0
  %201 = vmatprep.subr.mxu0 0.0
  %202 = vmatpush1.xpose.msra.mxu0 0.0
  %203 = vmatprep.subr.mxu0 0.0
  %204 = vmatpush1.xpose.msra.mxu0 0.0
  %205 = vmatprep.subr.mxu0 0.0
  %206 = vmatpush1.xpose.msra.mxu0 0.0
  %207 = vmatprep.subr.mxu0 0.0
  %208 = vmatpush1.xpose.msra.mxu0 0.0
  %209 = vmatprep.subr.mxu0 0.0
  %210 = vmatpush1.xpose.msra.mxu0 0.0
  %211 = vmatprep.subr.mxu0 0.0
  %212 = vmatpush1.xpose.msra.mxu0 0.0
  %213 = vmatprep.subr.mxu0 0.0
  %214 = vmatpush1.xpose.msra.mxu0 0.0
  %215 = vmatprep.subr.mxu0 0.0
  %216 = vmatpush1.xpose.msra.mxu0 0.0
  %217 = vmatprep.subr.mxu0 0.0
  %218 = vmatpush1.xpose.msra.mxu0 0.0
  %219 = vmatprep.subr.mxu0 0.0
  %220 = vmatpush1.xpose.msra.mxu0 0.0
  %221 = vmatprep.subr.mxu0 0.0
  %222 = vmatpush1.xpose.msra.mxu0 0.0
  %223 = vmatprep.subr.mxu0 0.0
  %224 = vmatpush1.xpose.msra.mxu0 0.0
  %225 = vmatprep.subr.mxu0 0.0
  %226 = vmatpush1.xpose.msra.mxu0 0.0
  %227 = vmatprep.mubr.f32.mxu0 %v19
  %228 = vmatmul.mubr.f32.gmra.mrb[0].mxu0 %v18
  %v229 = vpop.f32.mrb[0].mxu0
  %v230 = vadd.f32 %v155, %v229
  %v231 = vpop.f32.mrb[0].mxu0
  %232 = vmatprep.mubr.f32.mxu0 %v43
  %233 = vmatmul.mubr.f32.gmra.mrb[0].mxu0 %v42
  %v234 = vpop.f32.mrb[0].mxu0
  %v235 = vadd.f32 %v160, %v234
  %v236 = vpop.f32.mrb[0].mxu0
  %237 = vdwg.mxu0
  %238 = vmatprep.subr.mxu0 %v69
  %239 = vmatpush1.xpose.msra.mxu0 %v68
  %240 = vmatprep.subr.mxu0 0.0
  %241 = vmatpush1.xpose.msra.mxu0 0.0
  %242 = vmatprep.subr.mxu0 0.0
  %243 = vmatpush1.xpose.msra.mxu0 0.0
  %244 = vmatprep.subr.mxu0 0.0
  %245 = vmatpush1.xpose.msra.mxu0 0.0
  %246 = vmatprep.subr.mxu0 0.0
  %247 = vmatpush1.xpose.msra.mxu0 0.0
  %248 = vmatprep.subr.mxu0 0.0
  %249 = vmatpush1.xpose.msra.mxu0 0.0
  %250 = vmatprep.subr.mxu0 0.0
  %251 = vmatpush1.xpose.msra.mxu0 0.0
  %252 = vmatprep.subr.mxu0 0.0
  %253 = vmatpush1.xpose.msra.mxu0 0.0
  %254 = vmatprep.subr.mxu0 0.0
  %255 = vmatpush1.xpose.msra.mxu0 0.0
  %256 = vmatprep.subr.mxu0 0.0
  %257 = vmatpush1.xpose.msra.mxu0 0.0
  %258 = vmatprep.subr.mxu0 0.0
  %259 = vmatpush1.xpose.msra.mxu0 0.0
  %260 = vmatprep.subr.mxu0 0.0
  %261 = vmatpush1.xpose.msra.mxu0 0.0
  %262 = vmatprep.subr.mxu0 0.0
  %263 = vmatpush1.xpose.msra.mxu0 0.0
  %264 = vmatprep.subr.mxu0 0.0
  %265 = vmatpush1.xpose.msra.mxu0 0.0
  %266 = vmatprep.subr.mxu0 0.0
  %267 = vmatpush1.xpose.msra.mxu0 0.0
  %268 = vmatprep.subr.mxu0 0.0
  %269 = vmatpush1.xpose.msra.mxu0 0.0
  %270 = vmatprep.subr.mxu0 0.0
  %271 = vmatpush1.xpose.msra.mxu0 0.0
  %272 = vmatprep.subr.mxu0 0.0
  %273 = vmatpush1.xpose.msra.mxu0 0.0
  %274 = vmatprep.subr.mxu0 0.0
  %275 = vmatpush1.xpose.msra.mxu0 0.0
  %276 = vmatprep.subr.mxu0 0.0
  %277 = vmatpush1.xpose.msra.mxu0 0.0
  %278 = vmatprep.subr.mxu0 0.0
  %279 = vmatpush1.xpose.msra.mxu0 0.0
  %280 = vmatprep.subr.mxu0 0.0
  %281 = vmatpush1.xpose.msra.mxu0 0.0
  %282 = vmatprep.subr.mxu0 0.0
  %283 = vmatpush1.xpose.msra.mxu0 0.0
  %284 = vmatprep.subr.mxu0 0.0
  %285 = vmatpush1.xpose.msra.mxu0 0.0
  %286 = vmatprep.subr.mxu0 0.0
  %287 = vmatpush1.xpose.msra.mxu0 0.0
  %288 = vmatprep.subr.mxu0 0.0
  %289 = vmatpush1.xpose.msra.mxu0 0.0
  %290 = vmatprep.subr.mxu0 0.0
  %291 = vmatpush1.xpose.msra.mxu0 0.0
  %292 = vmatprep.subr.mxu0 0.0
  %293 = vmatpush1.xpose.msra.mxu0 0.0
  %294 = vmatprep.subr.mxu0 0.0
  %295 = vmatpush1.xpose.msra.mxu0 0.0
  %296 = vmatprep.subr.mxu0 0.0
  %297 = vmatpush1.xpose.msra.mxu0 0.0
  %298 = vmatprep.subr.mxu0 0.0
  %299 = vmatpush1.xpose.msra.mxu0 0.0
  %300 = vmatprep.subr.mxu0 0.0
  %301 = vmatpush1.xpose.msra.mxu0 0.0
  %302 = vmatprep.mubr.f32.mxu0 %v21
  %303 = vmatmul.mubr.f32.gmra.mrb[0].mxu0 %v20
  %v304 = vpop.f32.mrb[0].mxu0
  %v305 = vadd.f32 %v230, %v304
  %v306 = vpop.f32.mrb[0].mxu0
  %307 = vmatprep.mubr.f32.mxu0 %v45
  %308 = vmatmul.mubr.f32.gmra.mrb[0].mxu0 %v44
  %v309 = vpop.f32.mrb[0].mxu0
  %v310 = vadd.f32 %v235, %v309
  %v311 = vpop.f32.mrb[0].mxu0
  %312 = vdwg.mxu0
  %313 = vmatprep.subr.mxu0 %v71
  %314 = vmatpush1.xpose.msra.mxu0 %v70
  %315 = vmatprep.subr.mxu0 0.0
  %316 = vmatpush1.xpose.msra.mxu0 0.0
  %317 = vmatprep.subr.mxu0 0.0
  %318 = vmatpush1.xpose.msra.mxu0 0.0
  %319 = vmatprep.subr.mxu0 0.0
  %320 = vmatpush1.xpose.msra.mxu0 0.0
  %321 = vmatprep.subr.mxu0 0.0
  %322 = vmatpush1.xpose.msra.mxu0 0.0
  %323 = vmatprep.subr.mxu0 0.0
  %324 = vmatpush1.xpose.msra.mxu0 0.0
  %325 = vmatprep.subr.mxu0 0.0
  %326 = vmatpush1.xpose.msra.mxu0 0.0
  %327 = vmatprep.subr.mxu0 0.0
  %328 = vmatpush1.xpose.msra.mxu0 0.0
  %329 = vmatprep.subr.mxu0 0.0
  %330 = vmatpush1.xpose.msra.mxu0 0.0
  %331 = vmatprep.subr.mxu0 0.0
  %332 = vmatpush1.xpose.msra.mxu0 0.0
  %333 = vmatprep.subr.mxu0 0.0
  %334 = vmatpush1.xpose.msra.mxu0 0.0
  %335 = vmatprep.subr.mxu0 0.0
  %336 = vmatpush1.xpose.msra.mxu0 0.0
  %337 = vmatprep.subr.mxu0 0.0
  %338 = vmatpush1.xpose.msra.mxu0 0.0
  %339 = vmatprep.subr.mxu0 0.0
  %340 = vmatpush1.xpose.msra.mxu0 0.0
  %341 = vmatprep.subr.mxu0 0.0
  %342 = vmatpush1.xpose.msra.mxu0 0.0
  %343 = vmatprep.subr.mxu0 0.0
  %344 = vmatpush1.xpose.msra.mxu0 0.0
  %345 = vmatprep.subr.mxu0 0.0
  %346 = vmatpush1.xpose.msra.mxu0 0.0
  %347 = vmatprep.subr.mxu0 0.0
  %348 = vmatpush1.xpose.msra.mxu0 0.0
  %349 = vmatprep.subr.mxu0 0.0
  %350 = vmatpush1.xpose.msra.mxu0 0.0
  %351 = vmatprep.subr.mxu0 0.0
  %352 = vmatpush1.xpose.msra.mxu0 0.0
  %353 = vmatprep.subr.mxu0 0.0
  %354 = vmatpush1.xpose.msra.mxu0 0.0
  %355 = vmatprep.subr.mxu0 0.0
  %356 = vmatpush1.xpose.msra.mxu0 0.0
  %357 = vmatprep.subr.mxu0 0.0
  %358 = vmatpush1.xpose.msra.mxu0 0.0
  %359 = vmatprep.subr.mxu0 0.0
  %360 = vmatpush1.xpose.msra.mxu0 0.0
  %361 = vmatprep.subr.mxu0 0.0
  %362 = vmatpush1.xpose.msra.mxu0 0.0
  %363 = vmatprep.subr.mxu0 0.0
  %364 = vmatpush1.xpose.msra.mxu0 0.0
  %365 = vmatprep.subr.mxu0 0.0
  %366 = vmatpush1.xpose.msra.mxu0 0.0
  %367 = vmatprep.subr.mxu0 0.0
  %368 = vmatpush1.xpose.msra.mxu0 0.0
  %369 = vmatprep.subr.mxu0 0.0
  %370 = vmatpush1.xpose.msra.mxu0 0.0
  %371 = vmatprep.subr.mxu0 0.0
  %372 = vmatpush1.xpose.msra.mxu0 0.0
  %373 = vmatprep.subr.mxu0 0.0
  %374 = vmatpush1.xpose.msra.mxu0 0.0
  %375 = vmatprep.subr.mxu0 0.0
  %376 = vmatpush1.xpose.msra.mxu0 0.0
  %377 = vmatprep.mubr.f32.mxu0 %v23
  %378 = vmatmul.mubr.f32.gmra.mrb[0].mxu0 %v22
  %v379 = vpop.f32.mrb[0].mxu0
  %v380 = vadd.f32 %v305, %v379
  %v381 = vpop.f32.mrb[0].mxu0
  %382 = vmatprep.mubr.f32.mxu0 %v47
  %383 = vmatmul.mubr.f32.gmra.mrb[0].mxu0 %v46
  %v384 = vpop.f32.mrb[0].mxu0
  %v385 = vadd.f32 %v310, %v384
  %v386 = vpop.f32.mrb[0].mxu0
  %387 = vdwg.mxu0
  %388 = vmatprep.subr.mxu0 %v73
  %389 = vmatpush1.xpose.msra.mxu0 %v72
  %390 = vmatprep.subr.mxu0 0.0
  %391 = vmatpush1.xpose.msra.mxu0 0.0
  %392 = vmatprep.subr.mxu0 0.0
  %393 = vmatpush1.xpose.msra.mxu0 0.0
  %394 = vmatprep.subr.mxu0 0.0
  %395 = vmatpush1.xpose.msra.mxu0 0.0
  %396 = vmatprep.subr.mxu0 0.0
  %397 = vmatpush1.xpose.msra.mxu0 0.0
  %398 = vmatprep.subr.mxu0 0.0
  %399 = vmatpush1.xpose.msra.mxu0 0.0
  %400 = vmatprep.subr.mxu0 0.0
  %401 = vmatpush1.xpose.msra.mxu0 0.0
  %402 = vmatprep.subr.mxu0 0.0
  %403 = vmatpush1.xpose.msra.mxu0 0.0
  %404 = vmatprep.subr.mxu0 0.0
  %405 = vmatpush1.xpose.msra.mxu0 0.0
  %406 = vmatprep.subr.mxu0 0.0
  %407 = vmatpush1.xpose.msra.mxu0 0.0
  %408 = vmatprep.subr.mxu0 0.0
  %409 = vmatpush1.xpose.msra.mxu0 0.0
  %410 = vmatprep.subr.mxu0 0.0
  %411 = vmatpush1.xpose.msra.mxu0 0.0
  %412 = vmatprep.subr.mxu0 0.0
  %413 = vmatpush1.xpose.msra.mxu0 0.0
  %414 = vmatprep.subr.mxu0 0.0
  %415 = vmatpush1.xpose.msra.mxu0 0.0
  %416 = vmatprep.subr.mxu0 0.0
  %417 = vmatpush1.xpose.msra.mxu0 0.0
  %418 = vmatprep.subr.mxu0 0.0
  %419 = vmatpush1.xpose.msra.mxu0 0.0
  %420 = vmatprep.subr.mxu0 0.0
  %421 = vmatpush1.xpose.msra.mxu0 0.0
  %422 = vmatprep.subr.mxu0 0.0
  %423 = vmatpush1.xpose.msra.mxu0 0.0
  %424 = vmatprep.subr.mxu0 0.0
  %425 = vmatpush1.xpose.msra.mxu0 0.0
  %426 = vmatprep.subr.mxu0 0.0
  %427 = vmatpush1.xpose.msra.mxu0 0.0
  %428 = vmatprep.subr.mxu0 0.0
  %429 = vmatpush1.xpose.msra.mxu0 0.0
  %430 = vmatprep.subr.mxu0 0.0
  %431 = vmatpush1.xpose.msra.mxu0 0.0
  %432 = vmatprep.subr.mxu0 0.0
  %433 = vmatpush1.xpose.msra.mxu0 0.0
  %434 = vmatprep.subr.mxu0 0.0
  %435 = vmatpush1.xpose.msra.mxu0 0.0
  %436 = vmatprep.subr.mxu0 0.0
  %437 = vmatpush1.xpose.msra.mxu0 0.0
  %438 = vmatprep.subr.mxu0 0.0
  %439 = vmatpush1.xpose.msra.mxu0 0.0
  %440 = vmatprep.subr.mxu0 0.0
  %441 = vmatpush1.xpose.msra.mxu0 0.0
  %442 = vmatprep.subr.mxu0 0.0
  %443 = vmatpush1.xpose.msra.mxu0 0.0
  %444 = vmatprep.subr.mxu0 0.0
  %445 = vmatpush1.xpose.msra.mxu0 0.0
  %446 = vmatprep.subr.mxu0 0.0
  %447 = vmatpush1.xpose.msra.mxu0 0.0
  %448 = vmatprep.subr.mxu0 0.0
  %449 = vmatpush1.xpose.msra.mxu0 0.0
  %450 = vmatprep.subr.mxu0 0.0
  %451 = vmatpush1.xpose.msra.mxu0 0.0
  %452 = vmatprep.mubr.f32.mxu0 %v25
  %453 = vmatmul.mubr.f32.gmra.mrb[0].mxu0 %v24
  %v454 = vpop.f32.mrb[0].mxu0
  %v455 = vadd.f32 %v380, %v454
  %v456 = vpop.f32.mrb[0].mxu0
  %457 = vmatprep.mubr.f32.mxu0 %v49
  %458 = vmatmul.mubr.f32.gmra.mrb[0].mxu0 %v48
  %v459 = vpop.f32.mrb[0].mxu0
  %v460 = vadd.f32 %v385, %v459
  %v461 = vpop.f32.mrb[0].mxu0
  %462 = vdwg.mxu0
  %463 = vmatprep.subr.mxu0 %v75
  %464 = vmatpush1.xpose.msra.mxu0 %v74
  %465 = vmatprep.subr.mxu0 0.0
  %466 = vmatpush1.xpose.msra.mxu0 0.0
  %467 = vmatprep.subr.mxu0 0.0
  %468 = vmatpush1.xpose.msra.mxu0 0.0
  %469 = vmatprep.subr.mxu0 0.0
  %470 = vmatpush1.xpose.msra.mxu0 0.0
  %471 = vmatprep.subr.mxu0 0.0
  %472 = vmatpush1.xpose.msra.mxu0 0.0
  %473 = vmatprep.subr.mxu0 0.0
  %474 = vmatpush1.xpose.msra.mxu0 0.0
  %475 = vmatprep.subr.mxu0 0.0
  %476 = vmatpush1.xpose.msra.mxu0 0.0
  %477 = vmatprep.subr.mxu0 0.0
  %478 = vmatpush1.xpose.msra.mxu0 0.0
  %479 = vmatprep.subr.mxu0 0.0
  %480 = vmatpush1.xpose.msra.mxu0 0.0
  %481 = vmatprep.subr.mxu0 0.0
  %482 = vmatpush1.xpose.msra.mxu0 0.0
  %483 = vmatprep.subr.mxu0 0.0
  %484 = vmatpush1.xpose.msra.mxu0 0.0
  %485 = vmatprep.subr.mxu0 0.0
  %486 = vmatpush1.xpose.msra.mxu0 0.0
  %487 = vmatprep.subr.mxu0 0.0
  %488 = vmatpush1.xpose.msra.mxu0 0.0
  %489 = vmatprep.subr.mxu0 0.0
  %490 = vmatpush1.xpose.msra.mxu0 0.0
  %491 = vmatprep.subr.mxu0 0.0
  %492 = vmatpush1.xpose.msra.mxu0 0.0
  %493 = vmatprep.subr.mxu0 0.0
  %494 = vmatpush1.xpose.msra.mxu0 0.0
  %495 = vmatprep.subr.mxu0 0.0
  %496 = vmatpush1.xpose.msra.mxu0 0.0
  %497 = vmatprep.subr.mxu0 0.0
  %498 = vmatpush1.xpose.msra.mxu0 0.0
  %499 = vmatprep.subr.mxu0 0.0
  %500 = vmatpush1.xpose.msra.mxu0 0.0
  %501 = vmatprep.subr.mxu0 0.0
  %502 = vmatpush1.xpose.msra.mxu0 0.0
  %503 = vmatprep.subr.mxu0 0.0
  %504 = vmatpush1.xpose.msra.mxu0 0.0
  %505 = vmatprep.subr.mxu0 0.0
  %506 = vmatpush1.xpose.msra.mxu0 0.0
  %507 = vmatprep.subr.mxu0 0.0
  %508 = vmatpush1.xpose.msra.mxu0 0.0
  %509 = vmatprep.subr.mxu0 0.0
  %510 = vmatpush1.xpose.msra.mxu0 0.0
  %511 = vmatprep.subr.mxu0 0.0
  %512 = vmatpush1.xpose.msra.mxu0 0.0
  %513 = vmatprep.subr.mxu0 0.0
  %514 = vmatpush1.xpose.msra.mxu0 0.0
  %515 = vmatprep.subr.mxu0 0.0
  %516 = vmatpush1.xpose.msra.mxu0 0.0
  %517 = vmatprep.subr.mxu0 0.0
  %518 = vmatpush1.xpose.msra.mxu0 0.0
  %519 = vmatprep.subr.mxu0 0.0
  %520 = vmatpush1.xpose.msra.mxu0 0.0
  %521 = vmatprep.subr.mxu0 0.0
  %522 = vmatpush1.xpose.msra.mxu0 0.0
  %523 = vmatprep.subr.mxu0 0.0
  %524 = vmatpush1.xpose.msra.mxu0 0.0
  %525 = vmatprep.subr.mxu0 0.0
  %526 = vmatpush1.xpose.msra.mxu0 0.0
  %527 = vmatprep.mubr.f32.mxu0 %v27
  %528 = vmatmul.mubr.f32.gmra.mrb[0].mxu0 %v26
  %v529 = vpop.f32.mrb[0].mxu0
  %v530 = vadd.f32 %v455, %v529
  %v531 = vpop.f32.mrb[0].mxu0
  %532 = vmatprep.mubr.f32.mxu0 %v51
  %533 = vmatmul.mubr.f32.gmra.mrb[0].mxu0 %v50
  %v534 = vpop.f32.mrb[0].mxu0
  %v535 = vadd.f32 %v460, %v534
  %v536 = vpop.f32.mrb[0].mxu0
  %537 = vdwg.mxu0
  %538 = vmatprep.subr.mxu0 %v77
  %539 = vmatpush1.xpose.msra.mxu0 %v76
  %540 = vmatprep.subr.mxu0 0.0
  %541 = vmatpush1.xpose.msra.mxu0 0.0
  %542 = vmatprep.subr.mxu0 0.0
  %543 = vmatpush1.xpose.msra.mxu0 0.0
  %544 = vmatprep.subr.mxu0 0.0
  %545 = vmatpush1.xpose.msra.mxu0 0.0
  %546 = vmatprep.subr.mxu0 0.0
  %547 = vmatpush1.xpose.msra.mxu0 0.0
  %548 = vmatprep.subr.mxu0 0.0
  %549 = vmatpush1.xpose.msra.mxu0 0.0
  %550 = vmatprep.subr.mxu0 0.0
  %551 = vmatpush1.xpose.msra.mxu0 0.0
  %552 = vmatprep.subr.mxu0 0.0
  %553 = vmatpush1.xpose.msra.mxu0 0.0
  %554 = vmatprep.subr.mxu0 0.0
  %555 = vmatpush1.xpose.msra.mxu0 0.0
  %556 = vmatprep.subr.mxu0 0.0
  %557 = vmatpush1.xpose.msra.mxu0 0.0
  %558 = vmatprep.subr.mxu0 0.0
  %559 = vmatpush1.xpose.msra.mxu0 0.0
  %560 = vmatprep.subr.mxu0 0.0
  %561 = vmatpush1.xpose.msra.mxu0 0.0
  %562 = vmatprep.subr.mxu0 0.0
  %563 = vmatpush1.xpose.msra.mxu0 0.0
  %564 = vmatprep.subr.mxu0 0.0
  %565 = vmatpush1.xpose.msra.mxu0 0.0
  %566 = vmatprep.subr.mxu0 0.0
  %567 = vmatpush1.xpose.msra.mxu0 0.0
  %568 = vmatprep.subr.mxu0 0.0
  %569 = vmatpush1.xpose.msra.mxu0 0.0
  %570 = vmatprep.subr.mxu0 0.0
  %571 = vmatpush1.xpose.msra.mxu0 0.0
  %572 = vmatprep.subr.mxu0 0.0
  %573 = vmatpush1.xpose.msra.mxu0 0.0
  %574 = vmatprep.subr.mxu0 0.0
  %575 = vmatpush1.xpose.msra.mxu0 0.0
  %576 = vmatprep.subr.mxu0 0.0
  %577 = vmatpush1.xpose.msra.mxu0 0.0
  %578 = vmatprep.subr.mxu0 0.0
  %579 = vmatpush1.xpose.msra.mxu0 0.0
  %580 = vmatprep.subr.mxu0 0.0
  %581 = vmatpush1.xpose.msra.mxu0 0.0
  %582 = vmatprep.subr.mxu0 0.0
  %583 = vmatpush1.xpose.msra.mxu0 0.0
  %584 = vmatprep.subr.mxu0 0.0
  %585 = vmatpush1.xpose.msra.mxu0 0.0
  %586 = vmatprep.subr.mxu0 0.0
  %587 = vmatpush1.xpose.msra.mxu0 0.0
  %588 = vmatprep.subr.mxu0 0.0
  %589 = vmatpush1.xpose.msra.mxu0 0.0
  %590 = vmatprep.subr.mxu0 0.0
  %591 = vmatpush1.xpose.msra.mxu0 0.0
  %592 = vmatprep.subr.mxu0 0.0
  %593 = vmatpush1.xpose.msra.mxu0 0.0
  %594 = vmatprep.subr.mxu0 0.0
  %595 = vmatpush1.xpose.msra.mxu0 0.0
  %596 = vmatprep.subr.mxu0 0.0
  %597 = vmatpush1.xpose.msra.mxu0 0.0
  %598 = vmatprep.subr.mxu0 0.0
  %599 = vmatpush1.xpose.msra.mxu0 0.0
  %600 = vmatprep.subr.mxu0 0.0
  %601 = vmatpush1.xpose.msra.mxu0 0.0
  %602 = vmatprep.mubr.f32.mxu0 %v29
  %603 = vmatmul.mubr.f32.gmra.mrb[0].mxu0 %v28
  %v604 = vpop.f32.mrb[0].mxu0
  %v605 = vadd.f32 %v530, %v604
  %v606 = vpop.f32.mrb[0].mxu0
  %607 = vmatprep.mubr.f32.mxu0 %v53
  %608 = vmatmul.mubr.f32.gmra.mrb[0].mxu0 %v52
  %v609 = vpop.f32.mrb[0].mxu0
  %v610 = vadd.f32 %v535, %v609
  %v611 = vpop.f32.mrb[0].mxu0
  %612 = vdwg.mxu0
  %613 = vmatprep.subr.mxu0 %v79
  %614 = vmatpush1.xpose.msra.mxu0 %v78
  %615 = vmatprep.subr.mxu0 0.0
  %616 = vmatpush1.xpose.msra.mxu0 0.0
  %617 = vmatprep.subr.mxu0 0.0
  %618 = vmatpush1.xpose.msra.mxu0 0.0
  %619 = vmatprep.subr.mxu0 0.0
  %620 = vmatpush1.xpose.msra.mxu0 0.0
  %621 = vmatprep.subr.mxu0 0.0
  %622 = vmatpush1.xpose.msra.mxu0 0.0
  %623 = vmatprep.subr.mxu0 0.0
  %624 = vmatpush1.xpose.msra.mxu0 0.0
  %625 = vmatprep.subr.mxu0 0.0
  %626 = vmatpush1.xpose.msra.mxu0 0.0
  %627 = vmatprep.subr.mxu0 0.0
  %628 = vmatpush1.xpose.msra.mxu0 0.0
  %629 = vmatprep.subr.mxu0 0.0
  %630 = vmatpush1.xpose.msra.mxu0 0.0
  %631 = vmatprep.subr.mxu0 0.0
  %632 = vmatpush1.xpose.msra.mxu0 0.0
  %633 = vmatprep.subr.mxu0 0.0
  %634 = vmatpush1.xpose.msra.mxu0 0.0
  %635 = vmatprep.subr.mxu0 0.0
  %636 = vmatpush1.xpose.msra.mxu0 0.0
  %637 = vmatprep.subr.mxu0 0.0
  %638 = vmatpush1.xpose.msra.mxu0 0.0
  %639 = vmatprep.subr.mxu0 0.0
  %640 = vmatpush1.xpose.msra.mxu0 0.0
  %641 = vmatprep.subr.mxu0 0.0
  %642 = vmatpush1.xpose.msra.mxu0 0.0
  %643 = vmatprep.subr.mxu0 0.0
  %644 = vmatpush1.xpose.msra.mxu0 0.0
  %645 = vmatprep.subr.mxu0 0.0
  %646 = vmatpush1.xpose.msra.mxu0 0.0
  %647 = vmatprep.subr.mxu0 0.0
  %648 = vmatpush1.xpose.msra.mxu0 0.0
  %649 = vmatprep.subr.mxu0 0.0
  %650 = vmatpush1.xpose.msra.mxu0 0.0
  %651 = vmatprep.subr.mxu0 0.0
  %652 = vmatpush1.xpose.msra.mxu0 0.0
  %653 = vmatprep.subr.mxu0 0.0
  %654 = vmatpush1.xpose.msra.mxu0 0.0
  %655 = vmatprep.subr.mxu0 0.0
  %656 = vmatpush1.xpose.msra.mxu0 0.0
  %657 = vmatprep.subr.mxu0 0.0
  %658 = vmatpush1.xpose.msra.mxu0 0.0
  %659 = vmatprep.subr.mxu0 0.0
  %660 = vmatpush1.xpose.msra.mxu0 0.0
  %661 = vmatprep.subr.mxu0 0.0
  %662 = vmatpush1.xpose.msra.mxu0 0.0
  %663 = vmatprep.subr.mxu0 0.0
  %664 = vmatpush1.xpose.msra.mxu0 0.0
  %665 = vmatprep.subr.mxu0 0.0
  %666 = vmatpush1.xpose.msra.mxu0 0.0
  %667 = vmatprep.subr.mxu0 0.0
  %668 = vmatpush1.xpose.msra.mxu0 0.0
  %669 = vmatprep.subr.mxu0 0.0
  %670 = vmatpush1.xpose.msra.mxu0 0.0
  %671 = vmatprep.subr.mxu0 0.0
  %672 = vmatpush1.xpose.msra.mxu0 0.0
  %673 = vmatprep.subr.mxu0 0.0
  %674 = vmatpush1.xpose.msra.mxu0 0.0
  %675 = vmatprep.subr.mxu0 0.0
  %676 = vmatpush1.xpose.msra.mxu0 0.0
  %677 = vmatprep.mubr.f32.mxu0 %v31
  %678 = vmatmul.mubr.f32.gmra.mrb[0].mxu0 %v30
  %v679 = vpop.f32.mrb[0].mxu0
  %v680 = vadd.f32 %v605, %v679
  %v681 = vpop.f32.mrb[0].mxu0
  %682 = vmatprep.mubr.f32.mxu0 %v55
  %683 = vmatmul.mubr.f32.gmra.mrb[0].mxu0 %v54
  %v684 = vpop.f32.mrb[0].mxu0
  %v685 = vadd.f32 %v610, %v684
  %v686 = vpop.f32.mrb[0].mxu0
  %687 = vdwg.mxu0
  %688 = vmatprep.subr.mxu0 %v81
  %689 = vmatpush1.xpose.msra.mxu0 %v80
  %690 = vmatprep.subr.mxu0 0.0
  %691 = vmatpush1.xpose.msra.mxu0 0.0
  %692 = vmatprep.subr.mxu0 0.0
  %693 = vmatpush1.xpose.msra.mxu0 0.0
  %694 = vmatprep.subr.mxu0 0.0
  %695 = vmatpush1.xpose.msra.mxu0 0.0
  %696 = vmatprep.subr.mxu0 0.0
  %697 = vmatpush1.xpose.msra.mxu0 0.0
  %698 = vmatprep.subr.mxu0 0.0
  %699 = vmatpush1.xpose.msra.mxu0 0.0
  %700 = vmatprep.subr.mxu0 0.0
  %701 = vmatpush1.xpose.msra.mxu0 0.0
  %702 = vmatprep.subr.mxu0 0.0
  %703 = vmatpush1.xpose.msra.mxu0 0.0
  %704 = vmatprep.subr.mxu0 0.0
  %705 = vmatpush1.xpose.msra.mxu0 0.0
  %706 = vmatprep.subr.mxu0 0.0
  %707 = vmatpush1.xpose.msra.mxu0 0.0
  %708 = vmatprep.subr.mxu0 0.0
  %709 = vmatpush1.xpose.msra.mxu0 0.0
  %710 = vmatprep.subr.mxu0 0.0
  %711 = vmatpush1.xpose.msra.mxu0 0.0
  %712 = vmatprep.subr.mxu0 0.0
  %713 = vmatpush1.xpose.msra.mxu0 0.0
  %714 = vmatprep.subr.mxu0 0.0
  %715 = vmatpush1.xpose.msra.mxu0 0.0
  %716 = vmatprep.subr.mxu0 0.0
  %717 = vmatpush1.xpose.msra.mxu0 0.0
  %718 = vmatprep.subr.mxu0 0.0
  %719 = vmatpush1.xpose.msra.mxu0 0.0
  %720 = vmatprep.subr.mxu0 0.0
  %721 = vmatpush1.xpose.msra.mxu0 0.0
  %722 = vmatprep.subr.mxu0 0.0
  %723 = vmatpush1.xpose.msra.mxu0 0.0
  %724 = vmatprep.subr.mxu0 0.0
  %725 = vmatpush1.xpose.msra.mxu0 0.0
  %726 = vmatprep.subr.mxu0 0.0
  %727 = vmatpush1.xpose.msra.mxu0 0.0
  %728 = vmatprep.subr.mxu0 0.0
  %729 = vmatpush1.xpose.msra.mxu0 0.0
  %730 = vmatprep.subr.mxu0 0.0
  %731 = vmatpush1.xpose.msra.mxu0 0.0
  %732 = vmatprep.subr.mxu0 0.0
  %733 = vmatpush1.xpose.msra.mxu0 0.0
  %734 = vmatprep.subr.mxu0 0.0
  %735 = vmatpush1.xpose.msra.mxu0 0.0
  %736 = vmatprep.subr.mxu0 0.0
  %737 = vmatpush1.xpose.msra.mxu0 0.0
  %738 = vmatprep.subr.mxu0 0.0
  %739 = vmatpush1.xpose.msra.mxu0 0.0
  %740 = vmatprep.subr.mxu0 0.0
  %741 = vmatpush1.xpose.msra.mxu0 0.0
  %742 = vmatprep.subr.mxu0 0.0
  %743 = vmatpush1.xpose.msra.mxu0 0.0
  %744 = vmatprep.subr.mxu0 0.0
  %745 = vmatpush1.xpose.msra.mxu0 0.0
  %746 = vmatprep.subr.mxu0 0.0
  %747 = vmatpush1.xpose.msra.mxu0 0.0
  %748 = vmatprep.subr.mxu0 0.0
  %749 = vmatpush1.xpose.msra.mxu0 0.0
  %750 = vmatprep.subr.mxu0 0.0
  %751 = vmatpush1.xpose.msra.mxu0 0.0
  %752 = vmatprep.mubr.f32.mxu0 %v33
  %753 = vmatmul.mubr.f32.gmra.mrb[0].mxu0 %v32
  %v754 = vpop.f32.mrb[0].mxu0
  %v755 = vadd.f32 %v680, %v754
  %v756 = vpop.f32.mrb[0].mxu0
  %757 = vmatprep.mubr.f32.mxu0 %v57
  %758 = vmatmul.mubr.f32.gmra.mrb[0].mxu0 %v56
  %v759 = vpop.f32.mrb[0].mxu0
  %v760 = vadd.f32 %v685, %v759
  %v761 = vpop.f32.mrb[0].mxu0
  %762 = vdwg.mxu0
  %763 = vmatprep.subr.mxu0 %v83
  %764 = vmatpush1.xpose.msra.mxu0 %v82
  %765 = vmatprep.subr.mxu0 0.0
  %766 = vmatpush1.xpose.msra.mxu0 0.0
  %767 = vmatprep.subr.mxu0 0.0
  %768 = vmatpush1.xpose.msra.mxu0 0.0
  %769 = vmatprep.subr.mxu0 0.0
  %770 = vmatpush1.xpose.msra.mxu0 0.0
  %771 = vmatprep.subr.mxu0 0.0
  %772 = vmatpush1.xpose.msra.mxu0 0.0
  %773 = vmatprep.subr.mxu0 0.0
  %774 = vmatpush1.xpose.msra.mxu0 0.0
  %775 = vmatprep.subr.mxu0 0.0
  %776 = vmatpush1.xpose.msra.mxu0 0.0
  %777 = vmatprep.subr.mxu0 0.0
  %778 = vmatpush1.xpose.msra.mxu0 0.0
  %779 = vmatprep.subr.mxu0 0.0
  %780 = vmatpush1.xpose.msra.mxu0 0.0
  %781 = vmatprep.subr.mxu0 0.0
  %782 = vmatpush1.xpose.msra.mxu0 0.0
  %783 = vmatprep.subr.mxu0 0.0
  %784 = vmatpush1.xpose.msra.mxu0 0.0
  %785 = vmatprep.subr.mxu0 0.0
  %786 = vmatpush1.xpose.msra.mxu0 0.0
  %787 = vmatprep.subr.mxu0 0.0
  %788 = vmatpush1.xpose.msra.mxu0 0.0
  %789 = vmatprep.subr.mxu0 0.0
  %790 = vmatpush1.xpose.msra.mxu0 0.0
  %791 = vmatprep.subr.mxu0 0.0
  %792 = vmatpush1.xpose.msra.mxu0 0.0
  %793 = vmatprep.subr.mxu0 0.0
  %794 = vmatpush1.xpose.msra.mxu0 0.0
  %795 = vmatprep.subr.mxu0 0.0
  %796 = vmatpush1.xpose.msra.mxu0 0.0
  %797 = vmatprep.subr.mxu0 0.0
  %798 = vmatpush1.xpose.msra.mxu0 0.0
  %799 = vmatprep.subr.mxu0 0.0
  %800 = vmatpush1.xpose.msra.mxu0 0.0
  %801 = vmatprep.subr.mxu0 0.0
  %802 = vmatpush1.xpose.msra.mxu0 0.0
  %803 = vmatprep.subr.mxu0 0.0
  %804 = vmatpush1.xpose.msra.mxu0 0.0
  %805 = vmatprep.subr.mxu0 0.0
  %806 = vmatpush1.xpose.msra.mxu0 0.0
  %807 = vmatprep.subr.mxu0 0.0
  %808 = vmatpush1.xpose.msra.mxu0 0.0
  %809 = vmatprep.subr.mxu0 0.0
  %810 = vmatpush1.xpose.msra.mxu0 0.0
  %811 = vmatprep.subr.mxu0 0.0
  %812 = vmatpush1.xpose.msra.mxu0 0.0
  %813 = vmatprep.subr.mxu0 0.0
  %814 = vmatpush1.xpose.msra.mxu0 0.0
  %815 = vmatprep.subr.mxu0 0.0
  %816 = vmatpush1.xpose.msra.mxu0 0.0
  %817 = vmatprep.subr.mxu0 0.0
  %818 = vmatpush1.xpose.msra.mxu0 0.0
  %819 = vmatprep.subr.mxu0 0.0
  %820 = vmatpush1.xpose.msra.mxu0 0.0
  %821 = vmatprep.subr.mxu0 0.0
  %822 = vmatpush1.xpose.msra.mxu0 0.0
  %823 = vmatprep.subr.mxu0 0.0
  %824 = vmatpush1.xpose.msra.mxu0 0.0
  %825 = vmatprep.subr.mxu0 0.0
  %826 = vmatpush1.xpose.msra.mxu0 0.0
  %827 = vmatprep.mubr.f32.mxu0 %v35
  %828 = vmatmul.mubr.f32.gmra.mrb[0].mxu0 %v34
  %v829 = vpop.f32.mrb[0].mxu0
  %v830 = vadd.f32 %v755, %v829
  %v831 = vpop.f32.mrb[0].mxu0
  %832 = vmatprep.mubr.f32.mxu0 %v59
  %833 = vmatmul.mubr.f32.gmra.mrb[0].mxu0 %v58
  %v834 = vpop.f32.mrb[0].mxu0
  %v835 = vadd.f32 %v760, %v834
  %v836 = vpop.f32.mrb[0].mxu0
  %837 = vdwg.mxu0
  %838 = vmatprep.subr.mxu0 %v85
  %839 = vmatpush1.xpose.msra.mxu0 %v84
  %840 = vmatprep.subr.mxu0 0.0
  %841 = vmatpush1.xpose.msra.mxu0 0.0
  %842 = vmatprep.subr.mxu0 0.0
  %843 = vmatpush1.xpose.msra.mxu0 0.0
  %844 = vmatprep.subr.mxu0 0.0
  %845 = vmatpush1.xpose.msra.mxu0 0.0
  %846 = vmatprep.subr.mxu0 0.0
  %847 = vmatpush1.xpose.msra.mxu0 0.0
  %848 = vmatprep.subr.mxu0 0.0
  %849 = vmatpush1.xpose.msra.mxu0 0.0
  %850 = vmatprep.subr.mxu0 0.0
  %851 = vmatpush1.xpose.msra.mxu0 0.0
  %852 = vmatprep.subr.mxu0 0.0
  %853 = vmatpush1.xpose.msra.mxu0 0.0
  %854 = vmatprep.subr.mxu0 0.0
  %855 = vmatpush1.xpose.msra.mxu0 0.0
  %856 = vmatprep.subr.mxu0 0.0
  %857 = vmatpush1.xpose.msra.mxu0 0.0
  %858 = vmatprep.subr.mxu0 0.0
  %859 = vmatpush1.xpose.msra.mxu0 0.0
  %860 = vmatprep.subr.mxu0 0.0
  %861 = vmatpush1.xpose.msra.mxu0 0.0
  %862 = vmatprep.subr.mxu0 0.0
  %863 = vmatpush1.xpose.msra.mxu0 0.0
  %864 = vmatprep.subr.mxu0 0.0
  %865 = vmatpush1.xpose.msra.mxu0 0.0
  %866 = vmatprep.subr.mxu0 0.0
  %867 = vmatpush1.xpose.msra.mxu0 0.0
  %868 = vmatprep.subr.mxu0 0.0
  %869 = vmatpush1.xpose.msra.mxu0 0.0
  %870 = vmatprep.subr.mxu0 0.0
  %871 = vmatpush1.xpose.msra.mxu0 0.0
  %872 = vmatprep.subr.mxu0 0.0
  %873 = vmatpush1.xpose.msra.mxu0 0.0
  %874 = vmatprep.subr.mxu0 0.0
  %875 = vmatpush1.xpose.msra.mxu0 0.0
  %876 = vmatprep.subr.mxu0 0.0
  %877 = vmatpush1.xpose.msra.mxu0 0.0
  %878 = vmatprep.subr.mxu0 0.0
  %879 = vmatpush1.xpose.msra.mxu0 0.0
  %880 = vmatprep.subr.mxu0 0.0
  %881 = vmatpush1.xpose.msra.mxu0 0.0
  %882 = vmatprep.subr.mxu0 0.0
  %883 = vmatpush1.xpose.msra.mxu0 0.0
  %884 = vmatprep.subr.mxu0 0.0
  %885 = vmatpush1.xpose.msra.mxu0 0.0
  %886 = vmatprep.subr.mxu0 0.0
  %887 = vmatpush1.xpose.msra.mxu0 0.0
  %888 = vmatprep.subr.mxu0 0.0
  %889 = vmatpush1.xpose.msra.mxu0 0.0
  %890 = vmatprep.subr.mxu0 0.0
  %891 = vmatpush1.xpose.msra.mxu0 0.0
  %892 = vmatprep.subr.mxu0 0.0
  %893 = vmatpush1.xpose.msra.mxu0 0.0
  %894 = vmatprep.subr.mxu0 0.0
  %895 = vmatpush1.xpose.msra.mxu0 0.0
  %896 = vmatprep.subr.mxu0 0.0
  %897 = vmatpush1.xpose.msra.mxu0 0.0
  %898 = vmatprep.subr.mxu0 0.0
  %899 = vmatpush1.xpose.msra.mxu0 0.0
  %900 = vmatprep.subr.mxu0 0.0
  %901 = vmatpush1.xpose.msra.mxu0 0.0
  %902 = vmatprep.mubr.f32.mxu0 %v37
  %903 = vmatmul.mubr.f32.gmra.mrb[0].mxu0 %v36
  %v904 = vpop.f32.mrb[0].mxu0
  %v905 = vadd.f32 %v830, %v904
  %v906 = vpop.f32.mrb[0].mxu0
  %907 = vmatprep.mubr.f32.mxu0 %v61
  %908 = vmatmul.mubr.f32.gmra.mrb[0].mxu0 %v60
  %v909 = vpop.f32.mrb[0].mxu0
  %v910 = vadd.f32 %v835, %v909
  %v911 = vpop.f32.mrb[0].mxu0
  %912 = vdwg.mxu0
  %913 = vmatprep.subr.mxu0 %v87
  %914 = vmatpush1.xpose.msra.mxu0 %v86
  %915 = vmatprep.subr.mxu0 0.0
  %916 = vmatpush1.xpose.msra.mxu0 0.0
  %917 = vmatprep.subr.mxu0 0.0
  %918 = vmatpush1.xpose.msra.mxu0 0.0
  %919 = vmatprep.subr.mxu0 0.0
  %920 = vmatpush1.xpose.msra.mxu0 0.0
  %921 = vmatprep.subr.mxu0 0.0
  %922 = vmatpush1.xpose.msra.mxu0 0.0
  %923 = vmatprep.subr.mxu0 0.0
  %924 = vmatpush1.xpose.msra.mxu0 0.0
  %925 = vmatprep.subr.mxu0 0.0
  %926 = vmatpush1.xpose.msra.mxu0 0.0
  %927 = vmatprep.subr.mxu0 0.0
  %928 = vmatpush1.xpose.msra.mxu0 0.0
  %929 = vmatprep.subr.mxu0 0.0
  %930 = vmatpush1.xpose.msra.mxu0 0.0
  %931 = vmatprep.subr.mxu0 0.0
  %932 = vmatpush1.xpose.msra.mxu0 0.0
  %933 = vmatprep.subr.mxu0 0.0
  %934 = vmatpush1.xpose.msra.mxu0 0.0
  %935 = vmatprep.subr.mxu0 0.0
  %936 = vmatpush1.xpose.msra.mxu0 0.0
  %937 = vmatprep.subr.mxu0 0.0
  %938 = vmatpush1.xpose.msra.mxu0 0.0
  %939 = vmatprep.subr.mxu0 0.0
  %940 = vmatpush1.xpose.msra.mxu0 0.0
  %941 = vmatprep.subr.mxu0 0.0
  %942 = vmatpush1.xpose.msra.mxu0 0.0
  %943 = vmatprep.subr.mxu0 0.0
  %944 = vmatpush1.xpose.msra.mxu0 0.0
  %945 = vmatprep.subr.mxu0 0.0
  %946 = vmatpush1.xpose.msra.mxu0 0.0
  %947 = vmatprep.subr.mxu0 0.0
  %948 = vmatpush1.xpose.msra.mxu0 0.0
  %949 = vmatprep.subr.mxu0 0.0
  %950 = vmatpush1.xpose.msra.mxu0 0.0
  %951 = vmatprep.subr.mxu0 0.0
  %952 = vmatpush1.xpose.msra.mxu0 0.0
  %953 = vmatprep.subr.mxu0 0.0
  %954 = vmatpush1.xpose.msra.mxu0 0.0
  %955 = vmatprep.subr.mxu0 0.0
  %956 = vmatpush1.xpose.msra.mxu0 0.0
  %957 = vmatprep.subr.mxu0 0.0
  %958 = vmatpush1.xpose.msra.mxu0 0.0
  %959 = vmatprep.subr.mxu0 0.0
  %960 = vmatpush1.xpose.msra.mxu0 0.0
  %961 = vmatprep.subr.mxu0 0.0
  %962 = vmatpush1.xpose.msra.mxu0 0.0
  %963 = vmatprep.subr.mxu0 0.0
  %964 = vmatpush1.xpose.msra.mxu0 0.0
  %965 = vmatprep.subr.mxu0 0.0
  %966 = vmatpush1.xpose.msra.mxu0 0.0
  %967 = vmatprep.subr.mxu0 0.0
  %968 = vmatpush1.xpose.msra.mxu0 0.0
  %969 = vmatprep.subr.mxu0 0.0
  %970 = vmatpush1.xpose.msra.mxu0 0.0
  %971 = vmatprep.subr.mxu0 0.0
  %972 = vmatpush1.xpose.msra.mxu0 0.0
  %973 = vmatprep.subr.mxu0 0.0
  %974 = vmatpush1.xpose.msra.mxu0 0.0
  %975 = vmatprep.subr.mxu0 0.0
  %976 = vmatpush1.xpose.msra.mxu0 0.0
  %977 = vmatprep.mubr.f32.mxu0 %v39
  %978 = vmatmul.mubr.f32.gmra.mrb[0].mxu0 %v38
  %v979 = vpop.f32.mrb[0].mxu0
  %v980 = vadd.f32 %v905, %v979
  %v981 = vpop.f32.mrb[0].mxu0
  %982 = vmatprep.mubr.f32.mxu0 %v63
  %983 = vmatmul.mubr.f32.gmra.mrb[0].mxu0 %v62
  %v984 = vpop.f32.mrb[0].mxu0
  %v985 = vadd.f32 %v910, %v984
  %v986 = vpop.f32.mrb[0].mxu0
  %987 = vdwg.mxu0
  %989 = vset.pattern.permute.xlu0 0
  %990 = vperm.xlu0 %989, %v14
  %v991 = vpop.permute.xlu0 %990
  %994 = vset.pattern.permute.xlu0 0
  %995 = vperm.xlu0 %994, %v15
  %v996 = vpop.permute.xlu0 %995
  %v998 = vadd.f32 %v991, %v980
  %v999 = vadd.f32 %v996, %v985
  %vm1000 = vcmask 64512
  %1001 = vst.msk [vmem:[%s3] sm:$0xff] %vm1000, %v998
  %vm1002 = vcmask 58368
  %1003 = vst.msk [vmem:[%s3 + $0x8] sm:$0x3] %vm1002, %v999
  // Predicated region
  $region14: #{conv_fc_forward.1} parent=0 // pred_check
    _
  $region15: #{conv_fc_forward.1} parent=0 // pred_check_branch
    %1005 = sbr.rel (0) target = $region17
  $region16: #{conv_fc_forward.1} parent=0 // pred_region
    _
  $region17: #{conv_fc_forward.1} parent=0 // pred_fallthru
    _
  // Predicated region
  $region18: #{conv_fc_forward.1} parent=0 // pred_check
    _
  $region19: #{conv_fc_forward.1} parent=0 // pred_check_branch
    %1007 = sbr.rel (0) target = $region21
  $region20: #{conv_fc_forward.1} parent=0 // pred_region
    _
  $region21: #{conv_fc_forward.1} parent=0 // pred_fallthru
    _

</llo_original>
